<compile_context>
chip_gen: v6e
topology: v6e:2x2x1
jax: 0.10.0
libtpu: 0.0.40
codegen_flags: <defaults>
</compile_context>

<pallas_src>
import jax
import jax.numpy as jnp
from jax.experimental import pallas as pl
from jax.experimental.pallas import tpu as pltpu


def _reversible_kernel(x_ref, wf_t_ref, bf_ref, wg_t_ref, bg_ref, out_ref):
    ch = wf_t_ref.shape[0]

    # Channels on sublanes, spatial on lanes -> lane-dense loads/stores.
    x1 = x_ref[0, :ch, :]          # (Ch, T)
    x2 = x_ref[0, ch:, :]          # (Ch, T)

    # f(x2) = relu(Wf^T @ x2 + bf)   (1x1 conv over channels, f32 accumulate)
    f_out = jnp.dot(wf_t_ref[...], x2, preferred_element_type=jnp.float32)
    f_out = jnp.maximum(f_out + bf_ref[...], 0.0)
    y1 = x1 + f_out                           # f32 residual accumulate
    y1_act = y1.astype(x_ref.dtype)           # feed g at the streaming dtype

    # Store y1 before the second matmul: frees the f32 y1/x1 blocks early and
    # lets this half-store overlap the Wg matmul.
    out_ref[0, :ch, :] = y1.astype(out_ref.dtype)

    # g(y1) = relu(Wg^T @ y1 + bg)
    g_out = jnp.dot(wg_t_ref[...], y1_act, preferred_element_type=jnp.float32)
    g_out = jnp.maximum(g_out + bg_ref[...], 0.0)
    y2 = x2 + g_out
    out_ref[0, ch:, :] = y2.astype(out_ref.dtype)


def _round_up(v, m):
    return ((v + m - 1) // m) * m


def _vmem_capacity_bytes():
    try:
        return int(pltpu.get_tpu_info().vmem_capacity_bytes)
    except Exception:
        # Conservative fallback: v7x per-TensorCore VMEM.
        return 64 * 1024 * 1024


def _pick_tile_hw(hw, n_batch, c, act_bytes, budget_bytes):
    """Largest lane-multiple spatial tile that fits the VMEM streaming budget.

    Per-lane-column accounting:
      * (input + output) x double-buffered pipeline x C activations
      * ~6 live (Ch, tile) f32 intermediates inside the kernel body
        (x2 copy, f_out, y1, y1_act, g_out, y2).
    """
    ch = c // 2
    per_lane = 4 * c * act_bytes + 6 * ch * 4
    max_tile = max(128, (budget_bytes // per_lane) // 128 * 128)

    tile = min(max_tile, _round_up(hw, 128))
    n_tiles = -(-hw // tile)

    # Keep enough grid steps for megacore sharding + double-buffered pipeline.
    min_steps = 8
    if n_batch * n_tiles < min_steps:
        max_n_tiles = _round_up(hw, 128) // 128
        n_tiles = min(-(-min_steps // n_batch), max_n_tiles)

    # Rebalance: the padded tail tile wastes at most 127 lanes.
    tile = _round_up(-(-hw // n_tiles), 128)
    return tile


def reversible_block_forward(x_nchw, wf, bf, wg, bg, *, stream_dtype=None):
    """x_nchw: (N, C, H, W); wf/wg: (C/2, C/2) as (Cin, Cout); bf/bg: (C/2,).

    stream_dtype: optional dtype (e.g. jnp.bfloat16) to stream activations and
    weights through HBM in; MXU accumulation and residual adds stay f32.
    """
    N, C, H, W = x_nchw.shape
    assert C % 2 == 0
    Ch = C // 2
    HW = H * W

    act_dtype = jnp.dtype(stream_dtype) if stream_dtype is not None else jnp.dtype(x_nchw.dtype)
    act_bytes = act_dtype.itemsize

    # Channel-half slice must land on a packed sublane boundary for this dtype
    # (f32: 8, bf16: 16, int8/fp8: 32) or every block pays an XLU relayout.
    pack = {4: 8, 2: 16, 1: 32}[act_bytes]
    assert Ch % pack == 0, (
        f"C/2={Ch} must be a multiple of {pack} for dtype {act_dtype}")
    # TODO(synk): zero-pad channel halves (and wf/wg) in the wrapper instead of
    # asserting when Ch is not sublane-pack aligned.

    # Per-generation VMEM sizing: 128 MiB (v5e/v6e) vs 64 MiB per TC (v7x).
    cap = _vmem_capacity_bytes()
    vmem_limit = (cap * 3) // 4                 # ~96 MiB on 128-MiB parts, ~48 MiB on v7x
    # Resident weight/bias tiles (count double-buffered to be safe).
    resident = 2 * 2 * Ch * Ch * act_bytes + 4 * Ch * 4
    budget = max(1 << 20, vmem_limit // 2 - resident)
    # TODO(synk): for very large Ch (>= ~1.5K on v7x) add a K-tiling grid axis
    # with a pl.when-initialized accumulator instead of full weight residency.

    tile_hw = _pick_tile_hw(HW, N, C, act_bytes, budget)
    hw_pad = _round_up(HW, tile_hw)

    # Free reshape: NCHW is contiguous over (H, W).
    x_resh = x_nchw.reshape(N, C, HW)
    if act_dtype != x_nchw.dtype:
        x_resh = x_resh.astype(act_dtype)
    if hw_pad != HW:
        # TODO(synk): a BoundedSlice last tile would avoid this pad/slice copy.
        x_resh = jnp.pad(x_resh, ((0, 0), (0, 0), (0, hw_pad - HW)))

    wf_t = wf.T.astype(act_dtype)               # (Cout, Cin): conv is Wf^T @ x2
    wg_t = wg.T.astype(act_dtype)
    bf2 = bf.astype(jnp.float32).reshape(Ch, 1)  # bias added post-matmul in f32
    bg2 = bg.astype(jnp.float32).reshape(Ch, 1)

    grid = (N, hw_pad // tile_hw)
    xy_spec = pl.BlockSpec((1, C, tile_hw), lambda n, s: (n, 0, s))
    w_spec = pl.BlockSpec((Ch, Ch), lambda n, s: (0, 0))
    b_spec = pl.BlockSpec((Ch, 1), lambda n, s: (0, 0))

    out = pl.pallas_call(
        _reversible_kernel,
        out_shape=jax.ShapeDtypeStruct((N, C, hw_pad), act_dtype),
        grid_spec=pltpu.PrefetchScalarGridSpec(
            num_scalar_prefetch=0,
            grid=grid,
            in_specs=[xy_spec, w_spec, b_spec, w_spec, b_spec],
            out_specs=xy_spec,
        ),
        # Reversible blocks don't need x after the forward: alias it to the
        # output (the caller should donate x for this to be a real saving).
        input_output_aliases={0: 0},
        compiler_params=pltpu.CompilerParams(
            dimension_semantics=("parallel", "parallel"),
            vmem_limit_bytes=vmem_limit,
        ),
    )(x_resh, wf_t, bf2, wg_t, bg2)

    if hw_pad != HW:
        out = out[:, :, :HW]
    return out.reshape(N, C, H, W)


def _reference(x_nchw, wf, bf, wg, bg):
    N, C, H, W = x_nchw.shape
    Ch = C // 2
    x1 = x_nchw[:, :Ch]
    x2 = x_nchw[:, Ch:]

    def conv1x1_relu(z, w, b):  # z: (N, Ch, H, W), w: (Cin, Cout)
        o = jnp.einsum("nchw,cd->ndhw", z, w) + b[None, :, None, None]
        return jnp.maximum(o, 0.0)

    y1 = x1 + conv1x1_relu(x2, wf, bf)
    y2 = x2 + conv1x1_relu(y1, wg, bg)
    return jnp.concatenate([y1, y2], axis=1)


if __name__ == "__main__":
    key = jax.random.PRNGKey(0)
    k_x, k_wf, k_bf, k_wg, k_bg = jax.random.split(key, 5)

    N, C, H, W = 2, 32, 16, 16     # C/2 = 16 channels per stream, H*W = 256 lanes
    Ch = C // 2

    x = jax.random.normal(k_x, (N, C, H, W), dtype=jnp.float32)
    # Deterministic "conv" parameters (1x1 conv == channel matmul).
    wf = jax.random.normal(k_wf, (Ch, Ch), dtype=jnp.float32) * 0.1
    bf = jax.random.normal(k_bf, (Ch,), dtype=jnp.float32) * 0.1
    wg = jax.random.normal(k_wg, (Ch, Ch), dtype=jnp.float32) * 0.1
    bg = jax.random.normal(k_bg, (Ch,), dtype=jnp.float32) * 0.1

    ref = _reference(x, wf, bf, wg, bg)

    # bf16-streaming path (halves HBM bytes; accumulation stays f32).
    out_bf = jax.block_until_ready(
        reversible_block_forward(x, wf, bf, wg, bg, stream_dtype=jnp.bfloat16))
    assert out_bf.dtype == jnp.bfloat16
    assert jnp.allclose(out_bf.astype(jnp.float32), ref, atol=1e-1, rtol=5e-2), \
        "bf16 streaming path mismatch"

    # Awkward spatial size: H*W = 169 exercises the padded / rebalanced tile path.
    Hp, Wp = 13, 13
    xp = jax.random.normal(k_x, (N, C, Hp, Wp), dtype=jnp.float32)
    refp = _reference(xp, wf, bf, wg, bg)
    outp = jax.block_until_ready(reversible_block_forward(xp, wf, bf, wg, bg))
    assert outp.shape == (N, C, Hp, Wp)
    assert jnp.allclose(outp, refp, atol=1e-5, rtol=1e-5), "padded-tile path mismatch"

    # Main f32 path with donated input so the input/output alias is real.
    fwd = jax.jit(reversible_block_forward, donate_argnums=(0,),
                  static_argnames=("stream_dtype",))
    out = jax.block_until_ready(fwd(x, wf, bf, wg, bg))

    assert out.shape == (N, C, H, W)
    assert jnp.allclose(out, ref, atol=1e-5, rtol=1e-5), "mismatch vs reference"

    print("KERNEL_OK")
</pallas_src>

<mosaic_0001>
module attributes {stable_mosaic.version = 11 : i64} {
  func.func @_reversible_kernel(%arg0: i32, %arg1: i32, %arg2: memref<1x32x128xbf16, #tpu.memory_space<vmem>>, %arg3: memref<16x16xbf16, #tpu.memory_space<vmem>>, %arg4: memref<16x1xf32, #tpu.memory_space<vmem>>, %arg5: memref<16x16xbf16, #tpu.memory_space<vmem>>, %arg6: memref<16x1xf32, #tpu.memory_space<vmem>>, %arg7: memref<1x32x128xbf16, #tpu.memory_space<vmem>>) attributes {dimension_semantics = [#tpu.dimension_semantics<parallel>, #tpu.dimension_semantics<parallel>], iteration_bounds = array<i64: 2, 2>, scalar_prefetch = 0 : i64, scratch_operands = 0 : i64, tpu.core_type = #tpu.core_type<tc>, window_params = [{transform_indices = @transform_0, window_bounds = array<i64: 1, 32, 128>}, {pipeline_mode = #tpu.pipeline_mode<synchronous>, transform_indices = @transform_1, window_bounds = array<i64: 16, 16>}, {pipeline_mode = #tpu.pipeline_mode<synchronous>, transform_indices = @transform_2, window_bounds = array<i64: 16, 1>}, {pipeline_mode = #tpu.pipeline_mode<synchronous>, transform_indices = @transform_3, window_bounds = array<i64: 16, 16>}, {pipeline_mode = #tpu.pipeline_mode<synchronous>, transform_indices = @transform_4, window_bounds = array<i64: 16, 1>}, {transform_indices = @transform_5, window_bounds = array<i64: 1, 32, 128>}]} {
    %c0 = arith.constant 0 : index
    %c0_0 = arith.constant 0 : index
    %c0_1 = arith.constant 0 : index
    %0 = vector.load %arg2[%c0, %c0_0, %c0_1] : memref<1x32x128xbf16, #tpu.memory_space<vmem>>, vector<1x16x128xbf16>
    %1 = vector.shape_cast %0 : vector<1x16x128xbf16> to vector<16x128xbf16>
    %c0_2 = arith.constant 0 : index
    %c16 = arith.constant 16 : index
    %c0_3 = arith.constant 0 : index
    %2 = vector.load %arg2[%c0_2, %c16, %c0_3] : memref<1x32x128xbf16, #tpu.memory_space<vmem>>, vector<1x16x128xbf16>
    %3 = vector.shape_cast %2 : vector<1x16x128xbf16> to vector<16x128xbf16>
    %c0_4 = arith.constant 0 : index
    %c0_5 = arith.constant 0 : index
    %4 = vector.load %arg3[%c0_4, %c0_5] : memref<16x16xbf16, #tpu.memory_space<vmem>>, vector<16x16xbf16>
    %cst = arith.constant dense<0.000000e+00> : vector<16x128xf32>
    %5 = tpu.matmul %4, %3, %cst {dimension_numbers = #tpu.dot_dimension_numbers<[1], [0], [0], [1], [0, 0, 1, 1], [], []>} : vector<16x16xbf16>, vector<16x128xbf16>, vector<16x128xf32> -> vector<16x128xf32>
    %c0_6 = arith.constant 0 : index
    %c0_7 = arith.constant 0 : index
    %6 = vector.load %arg4[%c0_6, %c0_7] : memref<16x1xf32, #tpu.memory_space<vmem>>, vector<16x1xf32>
    %7 = vector.broadcast %6 : vector<16x1xf32> to vector<16x128xf32>
    %8 = arith.addf %5, %7 : vector<16x128xf32>
    %cst_8 = arith.constant 0.000000e+00 : f32
    %9 = vector.broadcast %cst_8 : f32 to vector<16x128xf32>
    %10 = arith.maximumf %8, %9 : vector<16x128xf32>
    %11 = arith.extf %1 : vector<16x128xbf16> to vector<16x128xf32>
    %12 = arith.addf %11, %10 : vector<16x128xf32>
    %13 = arith.truncf %12 : vector<16x128xf32> to vector<16x128xbf16>
    %14 = arith.truncf %12 : vector<16x128xf32> to vector<16x128xbf16>
    %c0_9 = arith.constant 0 : index
    %c0_10 = arith.constant 0 : index
    %c0_11 = arith.constant 0 : index
    %15 = vector.load %arg7[%c0_9, %c0_10, %c0_11] : memref<1x32x128xbf16, #tpu.memory_space<vmem>>, vector<1x16x128xbf16>
    %16 = vector.shape_cast %15 : vector<1x16x128xbf16> to vector<16x128xbf16>
    %17 = vector.shape_cast %14 : vector<16x128xbf16> to vector<1x16x128xbf16>
    tpu.vector_store %arg7[%c0_9, %c0_10, %c0_11], %17 {strides = array<i32>} : memref<1x32x128xbf16, #tpu.memory_space<vmem>>, vector<1x16x128xbf16>,
    %c0_12 = arith.constant 0 : index
    %c0_13 = arith.constant 0 : index
    %18 = vector.load %arg5[%c0_12, %c0_13] : memref<16x16xbf16, #tpu.memory_space<vmem>>, vector<16x16xbf16>
    %cst_14 = arith.constant dense<0.000000e+00> : vector<16x128xf32>
    %19 = tpu.matmul %18, %13, %cst_14 {dimension_numbers = #tpu.dot_dimension_numbers<[1], [0], [0], [1], [0, 0, 1, 1], [], []>} : vector<16x16xbf16>, vector<16x128xbf16>, vector<16x128xf32> -> vector<16x128xf32>
    %c0_15 = arith.constant 0 : index
    %c0_16 = arith.constant 0 : index
    %20 = vector.load %arg6[%c0_15, %c0_16] : memref<16x1xf32, #tpu.memory_space<vmem>>, vector<16x1xf32>
    %21 = vector.broadcast %20 : vector<16x1xf32> to vector<16x128xf32>
    %22 = arith.addf %19, %21 : vector<16x128xf32>
    %cst_17 = arith.constant 0.000000e+00 : f32
    %23 = vector.broadcast %cst_17 : f32 to vector<16x128xf32>
    %24 = arith.maximumf %22, %23 : vector<16x128xf32>
    %25 = arith.extf %3 : vector<16x128xbf16> to vector<16x128xf32>
    %26 = arith.addf %25, %24 : vector<16x128xf32>
    %27 = arith.truncf %26 : vector<16x128xf32> to vector<16x128xbf16>
    %c0_18 = arith.constant 0 : index
    %c16_19 = arith.constant 16 : index
    %c0_20 = arith.constant 0 : index
    %28 = vector.load %arg7[%c0_18, %c16_19, %c0_20] : memref<1x32x128xbf16, #tpu.memory_space<vmem>>, vector<1x16x128xbf16>
    %29 = vector.shape_cast %28 : vector<1x16x128xbf16> to vector<16x128xbf16>
    %30 = vector.shape_cast %27 : vector<16x128xbf16> to vector<1x16x128xbf16>
    tpu.vector_store %arg7[%c0_18, %c16_19, %c0_20], %30 {strides = array<i32>} : memref<1x32x128xbf16, #tpu.memory_space<vmem>>, vector<1x16x128xbf16>,
    return
  }
  func.func @transform_0(%arg0: i32, %arg1: i32) -> (i32, i32, i32) {
    %c0_i32 = arith.constant 0 : i32
    %c0_i32_0 = arith.constant 0 : i32
    return %arg0, %c0_i32, %arg1 : i32, i32, i32
  }
  func.func @transform_1(%arg0: i32, %arg1: i32) -> (i32, i32) {
    %c0_i32 = arith.constant 0 : i32
    %c0_i32_0 = arith.constant 0 : i32
    %c0_i32_1 = arith.constant 0 : i32
    return %c0_i32, %c0_i32_0 : i32, i32
  }
  func.func @transform_2(%arg0: i32, %arg1: i32) -> (i32, i32) {
    %c0_i32 = arith.constant 0 : i32
    %c0_i32_0 = arith.constant 0 : i32
    %c0_i32_1 = arith.constant 0 : i32
    return %c0_i32, %c0_i32_0 : i32, i32
  }
  func.func @transform_3(%arg0: i32, %arg1: i32) -> (i32, i32) {
    %c0_i32 = arith.constant 0 : i32
    %c0_i32_0 = arith.constant 0 : i32
    %c0_i32_1 = arith.constant 0 : i32
    return %c0_i32, %c0_i32_0 : i32, i32
  }
  func.func @transform_4(%arg0: i32, %arg1: i32) -> (i32, i32) {
    %c0_i32 = arith.constant 0 : i32
    %c0_i32_0 = arith.constant 0 : i32
    %c0_i32_1 = arith.constant 0 : i32
    return %c0_i32, %c0_i32_0 : i32, i32
  }
  func.func @transform_5(%arg0: i32, %arg1: i32) -> (i32, i32, i32) {
    %c0_i32 = arith.constant 0 : i32
    %c0_i32_0 = arith.constant 0 : i32
    return %arg0, %c0_i32, %arg1 : i32, i32, i32
  }
}

</mosaic_0001>

<llo_original>
// kernel: tpu_custom_call.1
$region0: #{tpu_custom_call.1}
  #allocation0 [shape = 'u32[]', space=smem, size = 0x4, offset = 0x4, fixed_abs, tag = 'smem constant byte address 0x4 - core index']
  #allocation1 [shape = 'u32[144,128]{1,0:T(1,128)}', space=vmem, size = 0x12000, scoped, tag = 'internal scratch']
  %s0 = inlined_call_operand.hbm [shape: bf16[2,32,256], index: 0, kind: input, shape index: {}, may-alias: {0,5}]
  %s1 = inlined_call_operand.vmem [shape: bf16[16,16], index: 1, kind: input, shape index: {}]
  %s2 = inlined_call_operand.vmem [shape: f32[16,1], index: 2, kind: input, shape index: {}]
  %s3 = inlined_call_operand.vmem [shape: bf16[16,16], index: 3, kind: input, shape index: {}]
  %s4 = inlined_call_operand.vmem [shape: f32[16,1], index: 4, kind: input, shape index: {}]
  %s5 = inlined_call_operand.hbm [shape: bf16[2,32,256], index: 5, kind: output, shape index: {}, may-alias: {0,5}]
  %s6 = sld [smem:[#allocation0]]
  $region57: #{tpu_custom_call.1} parent=0
    _
  %s8 = ssub.s32 1, %s6
  %s9 = scalar_select 0, %s8, %s6
  $region1: #{tpu_custom_call.1} parent=0
    #allocation2 [shape = 'u8[16384]{0}', space=vmem, size = 0x4000, scoped, tag = 'input window, operand 0']
    #allocation3 [shape = 's32[2]{0}', space=sflag, size = 0x8, scoped, tag = 'scoped memory for tpu_custom_call.1']
    #allocation4 [shape = 's32[2]{0}', space=sflag, size = 0x8, scoped, tag = 'scoped memory for tpu_custom_call.1']
    #allocation5 [shape = 'u8[16384]{0}', space=vmem, size = 0x4000, scoped, tag = 'output window, operand 0']
    %10 = vsyncpa [#allocation3], 0
    %s11 = scalar_lea.sflag [#allocation3], 1
    %12 = vsyncpa %s11, 0
    %13 = vsyncpa [#allocation4], 0
    %s14 = scalar_lea.sflag [#allocation4], 1
    %15 = vsyncpa %s14, 0
    loop: start=0, step=1, limit=6
    $region2: #{tpu_custom_call.1} parent=1 // loop_pre_header
      _
    $region3: #{tpu_custom_call.1} parent=1 // loop_header
      %s17 = sphi 0, %s21
      %p18 = scmp.ge.s32.totalorder %s17, 6
      %s24 = sphi 0, %s36
      %s25 = sphi 0, %s32
      %s26 = sphi 0, %s24
      %s27 = sphi 0, %s25
      %s28 = sphi 0, %s26
      %s29 = sphi 0, %s27
      %s41 = sphi 0, %s43
      %s44 = sphi 0, %s41
      %s45 = sphi 0, %s44
      %s61 = sphi 0, %s45
      %s65 = sphi 0, %s65
      %s67 = sphi 0, %s65
      %s68 = sphi 0, %s67
      %s82 = sphi 0, %s68
      %s86 = sphi 0, %s86
      %s88 = sphi 0, %s86
      %s89 = sphi 0, %s88
      %s103 = sphi 0, %s89
      %s107 = sphi 0, %s107
      %s109 = sphi 0, %s107
      %s110 = sphi 0, %s109
      %s124 = sphi 0, %s110
      %s128 = sphi 0, %s128
      %s130 = sphi 0, %s128
      %s131 = sphi 0, %s130
      %s145 = sphi 0, %s131
      %s153 = sphi 0, %s155
      %s156 = sphi 0, %s153
      %s157 = sphi 0, %s156
      %s173 = sphi 0, %s157
    $region4: #{tpu_custom_call.1} parent=1 // loop_header_branch
      %20 = sbr.rel (%p18) target = $region8
    $region5: #{tpu_custom_call.1} parent=1 // loop_body
      %s22 = ssub.s32 %s17, 1
      %s23 = ssub.s32 %s17, 2
      %s30 = sadd.s32 1, %s25
      %p31 = scmp.ge.s32.totalorder %s30, 2
      %s32 = scalar_select %p31, 0, %s30
      %s33 = sadd.s32 1, %s24
      %s34 = scalar_select %p31, %s33, %s24
      %p35 = scmp.ge.s32.totalorder %s34, 2
      %s36 = scalar_select %p35, 0, %s34
      %s37 = ssub.s32 %s24, %s36
      %s38 = ssub.s32 %s25, %s32
      %s39 = sor.u32 %s37, %s38
      %p40 = scmp.eq.s32.totalorder %s39, 0
      %s42 = sadd.s32 %s41, 1
      %s43 = scalar_select %p40, %s41, %s42
      %p46 = pneg %p40
      %p47 = scmp.eq.s32.totalorder %s17, 3
      %p48 = por %p46, %p47
      %p49 = scmp.ne.s32.totalorder %s41, %s44
      %p50 = scmp.eq.s32.totalorder %s17, 0
      %p51 = por %p49, %p50
      %p52 = scmp.ne.s32.totalorder %s41, %s44
      %p53 = scmp.eq.s32.totalorder %s22, 3
      %p54 = por %p52, %p53
      %p55 = scmp.ne.s32.totalorder %s44, %s45
      %p56 = scmp.eq.s32.totalorder %s22, 0
      %p57 = por %p55, %p56
      %p58 = scmp.ne.s32.totalorder %s44, %s45
      %p59 = scmp.eq.s32.totalorder %s23, 3
      %p60 = por %p58, %p59
      %p62 = scmp.ne.s32.totalorder %s45, %s61
      %p63 = scmp.eq.s32.totalorder %s23, 0
      %p64 = por %p62, %p63
      %s66 = sadd.s32 %s65, 1
      %p69 = scmp.eq.s32.totalorder %s17, 3
      %p70 = scmp.ne.s32.totalorder %s65, %s67
      %p71 = scmp.eq.s32.totalorder %s17, 0
      %p72 = por %p70, %p71
      %p73 = scmp.ne.s32.totalorder %s65, %s67
      %p74 = scmp.eq.s32.totalorder %s22, 3
      %p75 = por %p73, %p74
      %p76 = scmp.ne.s32.totalorder %s67, %s68
      %p77 = scmp.eq.s32.totalorder %s22, 0
      %p78 = por %p76, %p77
      %p79 = scmp.ne.s32.totalorder %s67, %s68
      %p80 = scmp.eq.s32.totalorder %s23, 3
      %p81 = por %p79, %p80
      %p83 = scmp.ne.s32.totalorder %s68, %s82
      %p84 = scmp.eq.s32.totalorder %s23, 0
      %p85 = por %p83, %p84
      %s87 = sadd.s32 %s86, 1
      %p90 = scmp.eq.s32.totalorder %s17, 3
      %p91 = scmp.ne.s32.totalorder %s86, %s88
      %p92 = scmp.eq.s32.totalorder %s17, 0
      %p93 = por %p91, %p92
      %p94 = scmp.ne.s32.totalorder %s86, %s88
      %p95 = scmp.eq.s32.totalorder %s22, 3
      %p96 = por %p94, %p95
      %p97 = scmp.ne.s32.totalorder %s88, %s89
      %p98 = scmp.eq.s32.totalorder %s22, 0
      %p99 = por %p97, %p98
      %p100 = scmp.ne.s32.totalorder %s88, %s89
      %p101 = scmp.eq.s32.totalorder %s23, 3
      %p102 = por %p100, %p101
      %p104 = scmp.ne.s32.totalorder %s89, %s103
      %p105 = scmp.eq.s32.totalorder %s23, 0
      %p106 = por %p104, %p105
      %s108 = sadd.s32 %s107, 1
      %p111 = scmp.eq.s32.totalorder %s17, 3
      %p112 = scmp.ne.s32.totalorder %s107, %s109
      %p113 = scmp.eq.s32.totalorder %s17, 0
      %p114 = por %p112, %p113
      %p115 = scmp.ne.s32.totalorder %s107, %s109
      %p116 = scmp.eq.s32.totalorder %s22, 3
      %p117 = por %p115, %p116
      %p118 = scmp.ne.s32.totalorder %s109, %s110
      %p119 = scmp.eq.s32.totalorder %s22, 0
      %p120 = por %p118, %p119
      %p121 = scmp.ne.s32.totalorder %s109, %s110
      %p122 = scmp.eq.s32.totalorder %s23, 3
      %p123 = por %p121, %p122
      %p125 = scmp.ne.s32.totalorder %s110, %s124
      %p126 = scmp.eq.s32.totalorder %s23, 0
      %p127 = por %p125, %p126
      %s129 = sadd.s32 %s128, 1
      %p132 = scmp.eq.s32.totalorder %s17, 3
      %p133 = scmp.ne.s32.totalorder %s128, %s130
      %p134 = scmp.eq.s32.totalorder %s17, 0
      %p135 = por %p133, %p134
      %p136 = scmp.ne.s32.totalorder %s128, %s130
      %p137 = scmp.eq.s32.totalorder %s22, 3
      %p138 = por %p136, %p137
      %p139 = scmp.ne.s32.totalorder %s130, %s131
      %p140 = scmp.eq.s32.totalorder %s22, 0
      %p141 = por %p139, %p140
      %p142 = scmp.ne.s32.totalorder %s130, %s131
      %p143 = scmp.eq.s32.totalorder %s23, 3
      %p144 = por %p142, %p143
      %p146 = scmp.ne.s32.totalorder %s131, %s145
      %p147 = scmp.eq.s32.totalorder %s23, 0
      %p148 = por %p146, %p147
      %s149 = ssub.s32 %s24, %s36
      %s150 = ssub.s32 %s25, %s32
      %s151 = sor.u32 %s149, %s150
      %p152 = scmp.eq.s32.totalorder %s151, 0
      %s154 = sadd.s32 %s153, 1
      %s155 = scalar_select %p152, %s153, %s154
      %p158 = pneg %p152
      %p159 = scmp.eq.s32.totalorder %s17, 3
      %p160 = por %p158, %p159
      %p161 = scmp.ne.s32.totalorder %s153, %s156
      %p162 = scmp.eq.s32.totalorder %s17, 0
      %p163 = por %p161, %p162
      %p164 = scmp.ne.s32.totalorder %s153, %s156
      %p165 = scmp.eq.s32.totalorder %s22, 3
      %p166 = por %p164, %p165
      %p167 = scmp.ne.s32.totalorder %s156, %s157
      %p168 = scmp.eq.s32.totalorder %s22, 0
      %p169 = por %p167, %p168
      %p170 = scmp.ne.s32.totalorder %s156, %s157
      %p171 = scmp.eq.s32.totalorder %s23, 3
      %p172 = por %p170, %p171
      %p174 = scmp.ne.s32.totalorder %s157, %s173
      %p175 = scmp.eq.s32.totalorder %s23, 0
      %p176 = por %p174, %p175
      %p177 = scmp.le.s32.totalorder 1, %s17
      %p178 = scmp.lt.s32.totalorder %s17, 5
      %p179 = pnand %p177, %p178
      %p180 = pneg %p179
      // Predicated region
      $region9: #{tpu_custom_call.1} parent=5 // pred_check
        _
      $region10: #{tpu_custom_call.1} parent=5 // pred_check_branch
        %182 = sbr.rel (%p179) target = $region12
      $region11: #{tpu_custom_call.1} parent=5 // pred_region
        %s183 = ssub.s32 %s17, 1
        // Predicated region
        $region13: #{tpu_custom_call.1} parent=11 // pred_check
          %p184 = pneg %p78
        $region14: #{tpu_custom_call.1} parent=11 // pred_check_branch
          %186 = sbr.rel (%p184) target = $region16
        $region15: #{tpu_custom_call.1} parent=11 // pred_region
          _
        $region16: #{tpu_custom_call.1} parent=11 // pred_fallthru
          _
        // Predicated region
        $region17: #{tpu_custom_call.1} parent=11 // pred_check
          %p187 = pneg %p99
        $region18: #{tpu_custom_call.1} parent=11 // pred_check_branch
          %189 = sbr.rel (%p187) target = $region20
        $region19: #{tpu_custom_call.1} parent=11 // pred_region
          _
        $region20: #{tpu_custom_call.1} parent=11 // pred_fallthru
          _
        // Predicated region
        $region21: #{tpu_custom_call.1} parent=11 // pred_check
          %p190 = pneg %p120
        $region22: #{tpu_custom_call.1} parent=11 // pred_check_branch
          %192 = sbr.rel (%p190) target = $region24
        $region23: #{tpu_custom_call.1} parent=11 // pred_region
          _
        $region24: #{tpu_custom_call.1} parent=11 // pred_fallthru
          _
        // Predicated region
        $region25: #{tpu_custom_call.1} parent=11 // pred_check
          %p193 = pneg %p141
        $region26: #{tpu_custom_call.1} parent=11 // pred_check_branch
          %195 = sbr.rel (%p193) target = $region28
        $region27: #{tpu_custom_call.1} parent=11 // pred_region
          _
        $region28: #{tpu_custom_call.1} parent=11 // pred_fallthru
          _
      $region12: #{tpu_custom_call.1} parent=5 // pred_fallthru
        _
      %p196 = scmp.lt.s32.totalorder %s17, 4
      // Predicated region
      $region29: #{tpu_custom_call.1} parent=5 // pred_check
        %p197 = pneg %p196
      $region30: #{tpu_custom_call.1} parent=5 // pred_check_branch
        %199 = sbr.rel (%p197) target = $region32
      $region31: #{tpu_custom_call.1} parent=5 // pred_region
        // Predicated region
        $region33: #{tpu_custom_call.1} parent=31 // pred_check
          %p200 = pneg %p51
        $region34: #{tpu_custom_call.1} parent=31 // pred_check_branch
          %202 = sbr.rel (%p200) target = $region36
        $region35: #{tpu_custom_call.1} parent=31 // pred_region
          %s203 = sand.u32 %s41, 1
          %s204 = scalar_lea.sflag [#allocation3], %s203
          %s205 = sand.u32 %s41, 1
          %s206 = smul.addr %s205, 16
          %s207 = scalar_lea.vmem [#allocation2], %s206
          %s209 = ssub.s32 256, 256
          %210 = vsyncadd %s204, %s209
          %s211 = smul.addr %s24, 8
          %s212 = sadd.s32 %s25, %s211
          %s213 = smul.addr %s212, 64
          %s214 = scalar_lea.hbm %s0, %s213
          %s215 = sshll.u32 %s207, 4
          %s216 = int_to_ptr.vmem [resolvable:$true] %s215
          %221 = dma.hbm_to_vmem [thread:$0]  %s214, 256, %s216, %s204, 128, 64, 4
        $region36: #{tpu_custom_call.1} parent=31 // pred_fallthru
          _
      $region32: #{tpu_custom_call.1} parent=5 // pred_fallthru
        _
      %p222 = scmp.le.s32.totalorder 1, %s17
      %p223 = scmp.lt.s32.totalorder %s17, 5
      %p224 = pnand %p222, %p223
      %p225 = pneg %p224
      // Predicated region
      $region37: #{tpu_custom_call.1} parent=5 // pred_check
        _
      $region38: #{tpu_custom_call.1} parent=5 // pred_check_branch
        %227 = sbr.rel (%p224) target = $region40
      $region39: #{tpu_custom_call.1} parent=5 // pred_region
        %s228 = ssub.s32 %s17, 1
        %s229 = sand.u32 %s44, 1
        %s230 = scalar_lea.sflag [#allocation3], %s229
        %s231 = sand.u32 %s44, 1
        %s232 = smul.addr %s231, 16
        %s233 = scalar_lea.vmem [#allocation2], %s232
        // Predicated region
        $region41: #{tpu_custom_call.1} parent=39 // pred_check
          %p234 = pneg %p57
        $region42: #{tpu_custom_call.1} parent=39 // pred_check_branch
          %236 = sbr.rel (%p234) target = $region44
        $region43: #{tpu_custom_call.1} parent=39 // pred_region
          %237 = dma.done %s230, 256
        $region44: #{tpu_custom_call.1} parent=39 // pred_fallthru
          _
        %s238 = sand.u32 %s44, 1
        %s239 = scalar_lea.sflag [#allocation3], %s238
        %s240 = sand.u32 %s44, 1
        %s241 = smul.addr %s240, 16
        %s242 = scalar_lea.vmem [#allocation2], %s241
        %p243 = pneg %p57
        %p244 = pneg %p54
        %p245 = pneg %p78
        %p246 = pneg %p75
        %p247 = pneg %p99
        %p248 = pneg %p96
        %p249 = pneg %p120
        %p250 = pneg %p117
        %p251 = pneg %p141
        %p252 = pneg %p138
        %p253 = pneg %p169
        %p254 = pneg %p166
        %s255 = sand.u32 %s156, 1
        %s256 = scalar_lea.sflag [#allocation4], %s255
        %s257 = sand.u32 %s156, 1
        %s258 = smul.addr %s257, 16
        %s259 = scalar_lea.vmem [#allocation5], %s258
        %v261 = vld [vmem:[%s233] sm:$0xf]
        %v262 = vld [vmem:[%s233 + $0x4] sm:$0xf]
        %v263 = vld [vmem:[%s233 + $0x8] sm:$0xf]
        %v264 = vld [vmem:[%s233 + $0xc] sm:$0xf]
        %v265 = vld [vmem:[%s1] sm:$0xf]
        %v266 = vld [vmem:[%s1 + $0x4] sm:$0xf]
        %v267 = vld [vmem:[%s2] sm:$0xff]
        %v268 = vld [vmem:[%s2 + $0x8] sm:$0xff]
        %270 = vset.pattern.permute.xlu0 0
        %271 = vperm.xlu0 %270, %v267
        %v272 = vpop.permute.xlu0 %271
        %275 = vset.pattern.permute.xlu0 0
        %276 = vperm.xlu0 %275, %v268
        %v277 = vpop.permute.xlu0 %276
        %v281 = vunpack.c.l.b16 %v265
        %v282 = vunpack.c.l.b16 %v266
        %v283 = vpack.c.b16 %v282, %v281
        %v286 = vunpack.c.l.b16 %v263
        %v287 = vunpack.c.l.b16 %v264
        %v288 = vpack.c.b16 %v287, %v286
        %vm290 = vcmask 130048
        %v292 = vsel %vm290, %v283, 0
        %294 = vmatprep.subr.bf16.mxu0 0
        %295 = vmatpush1.bf16.msra.mxu0 0
        %296 = vmatprep.subr.bf16.mxu0 0
        %297 = vmatpush1.bf16.msra.mxu0 0
        %298 = vmatprep.subr.bf16.mxu0 0
        %299 = vmatpush1.bf16.msra.mxu0 0
        %300 = vmatprep.subr.bf16.mxu0 0
        %301 = vmatpush1.bf16.msra.mxu0 0
        %302 = vmatprep.subr.bf16.mxu0 0
        %303 = vmatpush1.bf16.msra.mxu0 0
        %304 = vmatprep.subr.bf16.mxu0 0
        %305 = vmatpush1.bf16.msra.mxu0 0
        %306 = vmatprep.subr.bf16.mxu0 0
        %307 = vmatpush1.bf16.msra.mxu0 0
        %308 = vmatprep.subr.bf16.mxu0 0
        %309 = vmatpush1.bf16.msra.mxu0 %v288
        %310 = vmatprep.subr.bf16.mxu0 0
        %311 = vmatpush2.bf16.msra.mxu0 0
        %312 = vmatprep.subr.bf16.mxu0 0
        %313 = vmatpush2.bf16.msra.mxu0 0
        %314 = vmatprep.subr.bf16.mxu0 0
        %315 = vmatpush2.bf16.msra.mxu0 0
        %316 = vmatprep.subr.bf16.mxu0 0
        %317 = vmatpush2.bf16.msra.mxu0 0
        %318 = vmatprep.subr.bf16.mxu0 0
        %319 = vmatpush2.bf16.msra.mxu0 0
        %320 = vmatprep.subr.bf16.mxu0 0
        %321 = vmatpush2.bf16.msra.mxu0 0
        %322 = vmatprep.subr.bf16.mxu0 0
        %323 = vmatpush2.bf16.msra.mxu0 0
        %324 = vmatprep.subr.bf16.mxu0 0
        %325 = vmatpush2.bf16.msra.mxu0 0
        %326 = vmatprep.mubr.bf16.mxu0 0
        %327 = vmatmul.mubr.bf16.gmra.mxu0 %v292
        %v328 = vpop.f32.mrf.mxu0
        %v329 = vadd.f32 %v272, %v328
        %v330 = vpop.f32.mrf.mxu0
        %v331 = vpop.f32.mrf.mxu0
        %v332 = vadd.f32 %v277, %v331
        %v333 = vpop.f32.mrf.mxu0
        %334 = vdwg.mxu0
        %v335 = vmax.f32 %v329, 0.0
        %v336 = vmax.f32 %v332, 0.0
        %v337 = vunpack.c.l.bf16 %v261
        %v338 = vunpack.c.l.bf16 %v262
        %v339 = vadd.f32 %v337, %v335
        %v340 = vadd.f32 %v338, %v336
        %v341 = vpack.c.bf16 %v340, %v339
        %v343 = vunpack.c.l.b16 %v341
        %v344 = vunpack.c.h.b16 %v341
        %v345 = vpack.c.b16 %v343, %v343
        %v346 = vpack.c.b16 %v344, %v344
        %349 = vst [vmem:[%s259] sm:$0xf] %v345
        %350 = vst [vmem:[%s259 + $0x4] sm:$0xf] %v346
        %v351 = vld [vmem:[%s3] sm:$0xf]
        %v352 = vld [vmem:[%s3 + $0x4] sm:$0xf]
        %v353 = vld [vmem:[%s4] sm:$0xff]
        %v354 = vld [vmem:[%s4 + $0x8] sm:$0xff]
        %356 = vset.pattern.permute.xlu0 0
        %357 = vperm.xlu0 %356, %v353
        %v358 = vpop.permute.xlu0 %357
        %361 = vset.pattern.permute.xlu0 0
        %362 = vperm.xlu0 %361, %v354
        %v363 = vpop.permute.xlu0 %362
        %v367 = vunpack.c.l.b16 %v351
        %v368 = vunpack.c.l.b16 %v352
        %v369 = vpack.c.b16 %v368, %v367
        %v371 = vsel %vm290, %v369, 0
        %373 = vmatprep.subr.bf16.mxu0 0
        %374 = vmatpush1.bf16.msra.mxu0 0
        %375 = vmatprep.subr.bf16.mxu0 0
        %376 = vmatpush1.bf16.msra.mxu0 0
        %377 = vmatprep.subr.bf16.mxu0 0
        %378 = vmatpush1.bf16.msra.mxu0 0
        %379 = vmatprep.subr.bf16.mxu0 0
        %380 = vmatpush1.bf16.msra.mxu0 0
        %381 = vmatprep.subr.bf16.mxu0 0
        %382 = vmatpush1.bf16.msra.mxu0 0
        %383 = vmatprep.subr.bf16.mxu0 0
        %384 = vmatpush1.bf16.msra.mxu0 0
        %385 = vmatprep.subr.bf16.mxu0 0
        %386 = vmatpush1.bf16.msra.mxu0 0
        %387 = vmatprep.subr.bf16.mxu0 0
        %388 = vmatpush1.bf16.msra.mxu0 %v341
        %389 = vmatprep.subr.bf16.mxu0 0
        %390 = vmatpush2.bf16.msra.mxu0 0
        %391 = vmatprep.subr.bf16.mxu0 0
        %392 = vmatpush2.bf16.msra.mxu0 0
        %393 = vmatprep.subr.bf16.mxu0 0
        %394 = vmatpush2.bf16.msra.mxu0 0
        %395 = vmatprep.subr.bf16.mxu0 0
        %396 = vmatpush2.bf16.msra.mxu0 0
        %397 = vmatprep.subr.bf16.mxu0 0
        %398 = vmatpush2.bf16.msra.mxu0 0
        %399 = vmatprep.subr.bf16.mxu0 0
        %400 = vmatpush2.bf16.msra.mxu0 0
        %401 = vmatprep.subr.bf16.mxu0 0
        %402 = vmatpush2.bf16.msra.mxu0 0
        %403 = vmatprep.subr.bf16.mxu0 0
        %404 = vmatpush2.bf16.msra.mxu0 0
        %405 = vmatprep.mubr.bf16.mxu0 0
        %406 = vmatmul.mubr.bf16.gmra.mxu0 %v371
        %v407 = vpop.f32.mrf.mxu0
        %v408 = vadd.f32 %v358, %v407
        %v409 = vpop.f32.mrf.mxu0
        %v410 = vpop.f32.mrf.mxu0
        %v411 = vadd.f32 %v363, %v410
        %v412 = vpop.f32.mrf.mxu0
        %413 = vdwg.mxu0
        %v414 = vmax.f32 %v408, 0.0
        %v415 = vmax.f32 %v411, 0.0
        %v416 = vunpack.c.l.bf16 %v263
        %v417 = vunpack.c.l.bf16 %v264
        %v418 = vadd.f32 %v416, %v414
        %v419 = vadd.f32 %v417, %v415
        %v420 = vpack.c.bf16 %v419, %v418
        %v422 = vunpack.c.l.b16 %v420
        %v423 = vunpack.c.h.b16 %v420
        %v424 = vpack.c.b16 %v422, %v422
        %v425 = vpack.c.b16 %v423, %v423
        %428 = vst [vmem:[%s259 + $0x8] sm:$0xf] %v424
        %429 = vst [vmem:[%s259 + $0xc] sm:$0xf] %v425
        %s430 = sand.u32 %s156, 1
        %s431 = scalar_lea.sflag [#allocation4], %s430
        %s432 = sand.u32 %s156, 1
        %s433 = smul.addr %s432, 16
        %s434 = scalar_lea.vmem [#allocation5], %s433
        // Predicated region
        $region45: #{tpu_custom_call.1} parent=39 // pred_check
          %p435 = pneg %p166
        $region46: #{tpu_custom_call.1} parent=39 // pred_check_branch
          %437 = sbr.rel (%p435) target = $region48
        $region47: #{tpu_custom_call.1} parent=39 // pred_region
          %s439 = ssub.s32 256, 256
          %440 = vsyncadd %s431, %s439
          %s441 = smul.addr %s26, 8
          %s442 = sadd.s32 %s27, %s441
          %s443 = smul.addr %s442, 64
          %s444 = scalar_lea.hbm %s5, %s443
          %s445 = sshll.u32 %s434, 4
          %s446 = int_to_ptr.vmem [resolvable:$true] %s445
          %451 = dma.vmem_to_hbm [thread:$0]  %s446, 256, %s444, %s431, 64, 128, 4
        $region48: #{tpu_custom_call.1} parent=39 // pred_fallthru
          _
      $region40: #{tpu_custom_call.1} parent=5 // pred_fallthru
        _
      %p452 = scmp.le.s32.totalorder 2, %s17
      // Predicated region
      $region49: #{tpu_custom_call.1} parent=5 // pred_check
        %p453 = pneg %p452
      $region50: #{tpu_custom_call.1} parent=5 // pred_check_branch
        %455 = sbr.rel (%p453) target = $region52
      $region51: #{tpu_custom_call.1} parent=5 // pred_region
        %s456 = ssub.s32 %s17, 2
        // Predicated region
        $region53: #{tpu_custom_call.1} parent=51 // pred_check
          %p457 = pneg %p172
        $region54: #{tpu_custom_call.1} parent=51 // pred_check_branch
          %459 = sbr.rel (%p457) target = $region56
        $region55: #{tpu_custom_call.1} parent=51 // pred_region
          %s460 = sand.u32 %s157, 1
          %s461 = scalar_lea.sflag [#allocation4], %s460
          %s462 = sand.u32 %s157, 1
          %s463 = smul.addr %s462, 16
          %s464 = scalar_lea.vmem [#allocation5], %s463
          %465 = dma.done %s461, 256
        $region56: #{tpu_custom_call.1} parent=51 // pred_fallthru
          _
      $region52: #{tpu_custom_call.1} parent=5 // pred_fallthru
        _
    $region6: #{tpu_custom_call.1} parent=1 // loop_footer
      %s21 = sadd.s32 1, %s17
    $region7: #{tpu_custom_call.1} parent=1 // loop_footer_branch
      %16 = sbr.rel target = $region3
    $region8: #{tpu_custom_call.1} parent=1 // loop_exit
      _
    %466 = vsyncpa [#allocation3], 1
    %s467 = scalar_lea.sflag [#allocation3], 1
    %468 = vsyncpa %s467, 1
    %469 = vsyncpa [#allocation4], 1
    %s470 = scalar_lea.sflag [#allocation4], 1
    %471 = vsyncpa %s470, 1

</llo_original>
